<compile_context>
chip_gen: v6e
topology: v6e:2x2x1
jax: 0.10.0
libtpu: 0.0.40
codegen_flags: <defaults>
</compile_context>

<pallas_src>
import functools

import jax
import jax.numpy as jnp
import numpy as np
from jax.experimental import pallas as pl
from jax.experimental.pallas import tpu as pltpu

EPS = 1e-5


def basic_block_kernel(x_ref, shift_ref, sel_ref, w1_ref, w2_ref,
                       g1_ref, b1_ref, g2_ref, b2_ref, out_ref, *, inv_m):
    """Fully fused BasicBlock forward on packed (N*H, W*C) activations.

    x_ref    : (N*H, W*C)     packed input, also the residual
    shift_ref: (2, N*H, N*H)  row-shift matrices for the dy=0 / dy=2 taps
                              (image-edge zeroing baked in)
    sel_ref  : (W*C, W*C)     sel[i,j] = 1 iff lanes i and j hold the same channel
    w?_ref   : (3*W*C, W*C)   folded im2col conv weights (dx taps pre-applied)
    g?,b?    : (1, W*C)       BatchNorm affine params tiled to the lane layout
    out_ref  : (N*H, W*C)
    """
    x = x_ref[...]
    sel = sel_ref[...]

    def conv(v, w_ref):
        # dy = 0 / dy = 2 taps via two tiny row-shift matmuls; dy = 1 is v itself.
        vm = jnp.dot(shift_ref[0], v, preferred_element_type=jnp.float32)
        vp = jnp.dot(shift_ref[1], v, preferred_element_type=jnp.float32)
        cols = jnp.concatenate([vm, v, vp], axis=1)            # (N*H, 3*W*C)
        # single lane-dense im2col matmul, K = 3*W*C
        return jnp.dot(cols, w_ref[...], preferred_element_type=jnp.float32)

    def bn(acc, gamma, beta):
        # train-mode BatchNorm2d: per-channel mean / biased variance over N*H*W,
        # single pass (sum & sum-of-squares), re-tiled over lanes by `sel`.
        s1 = jnp.dot(jnp.sum(acc, axis=0, keepdims=True), sel,
                     preferred_element_type=jnp.float32)
        s2 = jnp.dot(jnp.sum(acc * acc, axis=0, keepdims=True), sel,
                     preferred_element_type=jnp.float32)
        mean = s1 * inv_m
        var = s2 * inv_m - mean * mean
        return (acc - mean) * jax.lax.rsqrt(var + EPS) * gamma + beta

    h = jnp.maximum(bn(conv(x, w1_ref), g1_ref[...], b1_ref[...]), 0.0)
    y = bn(conv(h, w2_ref), g2_ref[...], b2_ref[...]) + x       # residual add
    out_ref[...] = jnp.maximum(y, 0.0).astype(out_ref.dtype)
    # TODO(synk): running_mean/running_var momentum updates (a training-time
    # side effect of nn.BatchNorm2d) are not materialized; forward output is
    # unaffected.


def _fold_conv_weight(wt, W):
    """PyTorch (Cout, Cin, 3, 3) conv weight -> (3*W*Cin, W*Cout) folded weight.

    Row index = dy*(W*Cin) + w_src*Cin + ci, column = w_dst*Cout + co; the dx
    taps (and the w-edge zero padding) are encoded by the block structure.
    """
    wt = np.asarray(wt, dtype=np.float32)
    cout, cin = wt.shape[0], wt.shape[1]
    A = np.zeros((3, W * cin, W * cout), dtype=np.float32)
    for dy in range(3):
        for dx in range(3):
            blk = wt[:, :, dy, dx].T                            # (Cin, Cout)
            for w in range(W):
                wp = w + dx - 1                                 # source column
                if 0 <= wp < W:
                    A[dy, wp * cin:(wp + 1) * cin, w * cout:(w + 1) * cout] = blk
    return jnp.asarray(A.reshape(3 * W * cin, W * cout))


def _row_shift_mats(N, H):
    """(2, N*H, N*H): [r -> r-1] and [r -> r+1] shifts, zeroed at image edges."""
    R = N * H
    h = np.arange(R) % H
    s_m1 = np.eye(R, k=-1, dtype=np.float32)    # (s_m1 @ v)[r] = v[r-1]
    s_p1 = np.eye(R, k=1, dtype=np.float32)     # (s_p1 @ v)[r] = v[r+1]
    s_m1[h == 0, :] = 0.0                       # h-1 off the image -> zero pad
    s_p1[h == H - 1, :] = 0.0                   # h+1 off the image -> zero pad
    return jnp.asarray(np.stack([s_m1, s_p1]))


def _channel_selector(W, C):
    lane = np.arange(W * C)
    return jnp.asarray((lane[:, None] % C == lane[None, :] % C).astype(np.float32))


def prepare_params(raw, W):
    """One-time parameter repack (hoisted off the per-forward path)."""
    tile = lambda v: jnp.asarray(np.tile(np.asarray(v, np.float32), W)[None, :])
    return {
        "w1": _fold_conv_weight(raw["w1"], W),
        "w2": _fold_conv_weight(raw["w2"], W),
        "g1": tile(raw["g1"]), "b1": tile(raw["b1"]),
        "g2": tile(raw["g2"]), "b2": tile(raw["b2"]),
    }


@jax.jit
def basic_block_forward(x_nchw, packed):
    N, C, H, W = x_nchw.shape
    xp = jnp.transpose(x_nchw, (0, 2, 3, 1)).reshape(N * H, W * C)
    xp = xp.astype(jnp.float32)
    shifts = _row_shift_mats(N, H)          # shape-only constants, folded by XLA
    sel = _channel_selector(W, C)
    vmem = pl.BlockSpec(memory_space=pltpu.MemorySpace.VMEM)
    kernel = functools.partial(basic_block_kernel, inv_m=1.0 / float(N * H * W))
    # Single program, whole problem resident in VMEM (<1 MiB) -> no grid needed
    # at this size; one launch instead of two, no HBM trip for the conv1 output.
    out = pl.pallas_call(
        kernel,
        out_shape=jax.ShapeDtypeStruct((N * H, W * C), jnp.float32),
        in_specs=[vmem] * 9,
        out_specs=vmem,
    )(xp, shifts, sel, packed["w1"], packed["w2"],
      packed["g1"], packed["b1"], packed["g2"], packed["b2"])
    return jnp.transpose(out.reshape(N, H, W, C), (0, 3, 1, 2))


def ref_forward(x, p):
    """Pure-JAX reference of BasicBlock.forward (training-mode BN)."""
    def conv(y, w):
        return jax.lax.conv_general_dilated(
            y, w, window_strides=(1, 1), padding=((1, 1), (1, 1)),
            dimension_numbers=("NCHW", "OIHW", "NCHW"))

    def bn(y, g, b):
        mean = y.mean(axis=(0, 2, 3), keepdims=True)
        var = ((y - mean) ** 2).mean(axis=(0, 2, 3), keepdims=True)
        return ((y - mean) * jax.lax.rsqrt(var + EPS)
                * g.reshape(1, -1, 1, 1) + b.reshape(1, -1, 1, 1))

    out = jnp.maximum(bn(conv(x, p["w1"]), p["g1"], p["b1"]), 0.0)
    out = bn(conv(out, p["w2"]), p["g2"], p["b2"])
    return jnp.maximum(out + x, 0.0)


if __name__ == "__main__":
    key = jax.random.PRNGKey(0)
    N, C, H, W = 2, 8, 16, 16  # inplanes = planes = 8, stride = 1, downsample = None
    ks = jax.random.split(key, 7)
    fan_in = 9 * C
    params = {
        "w1": jax.random.normal(ks[0], (C, C, 3, 3), jnp.float32) * np.sqrt(2.0 / fan_in),
        "w2": jax.random.normal(ks[1], (C, C, 3, 3), jnp.float32) * np.sqrt(2.0 / fan_in),
        "g1": 1.0 + 0.1 * jax.random.normal(ks[2], (C,), jnp.float32),
        "b1": 0.1 * jax.random.normal(ks[3], (C,), jnp.float32),
        "g2": 1.0 + 0.1 * jax.random.normal(ks[4], (C,), jnp.float32),
        "b2": 0.1 * jax.random.normal(ks[5], (C,), jnp.float32),
    }
    x = jax.random.normal(ks[6], (N, C, H, W), jnp.float32)

    packed = prepare_params(params, W)      # one-time weight/affine repack
    out = jax.block_until_ready(basic_block_forward(x, packed))
    ref = jax.block_until_ready(ref_forward(x, params))
    assert out.shape == (N, C, H, W) and out.dtype == jnp.float32
    np.testing.assert_allclose(np.asarray(out), np.asarray(ref), rtol=1e-4, atol=1e-4)
    print("KERNEL_OK")
</pallas_src>

<mosaic_0001>
module attributes {stable_mosaic.version = 11 : i64} {
  func.func @basic_block_kernel(%arg0: memref<32x128xf32, #tpu.memory_space<vmem>>, %arg1: memref<2x32x32xf32, #tpu.memory_space<vmem>>, %arg2: memref<128x128xf32, #tpu.memory_space<vmem>>, %arg3: memref<384x128xf32, #tpu.memory_space<vmem>>, %arg4: memref<384x128xf32, #tpu.memory_space<vmem>>, %arg5: memref<1x128xf32, #tpu.memory_space<vmem>>, %arg6: memref<1x128xf32, #tpu.memory_space<vmem>>, %arg7: memref<1x128xf32, #tpu.memory_space<vmem>>, %arg8: memref<1x128xf32, #tpu.memory_space<vmem>>, %arg9: memref<32x128xf32, #tpu.memory_space<vmem>>) attributes {dimension_semantics = [], scalar_prefetch = 0 : i64, scratch_operands = 0 : i64, tpu.core_type = #tpu.core_type<tc>} {
    %c0 = arith.constant 0 : index
    %c0_0 = arith.constant 0 : index
    %0 = vector.load %arg0[%c0, %c0_0] : memref<32x128xf32, #tpu.memory_space<vmem>>, vector<32x128xf32>
    %c0_1 = arith.constant 0 : index
    %c0_2 = arith.constant 0 : index
    %1 = vector.load %arg2[%c0_1, %c0_2] : memref<128x128xf32, #tpu.memory_space<vmem>>, vector<128x128xf32>
    %c0_3 = arith.constant 0 : index
    %c0_4 = arith.constant 0 : index
    %c0_5 = arith.constant 0 : index
    %2 = vector.load %arg1[%c0_3, %c0_4, %c0_5] : memref<2x32x32xf32, #tpu.memory_space<vmem>>, vector<1x32x32xf32>
    %3 = vector.shape_cast %2 : vector<1x32x32xf32> to vector<32x32xf32>
    %cst = arith.constant dense<0.000000e+00> : vector<32x128xf32>
    %4 = tpu.matmul %3, %0, %cst {dimension_numbers = #tpu.dot_dimension_numbers<[1], [0], [0], [1], [0, 0, 1, 1], [], []>} : vector<32x32xf32>, vector<32x128xf32>, vector<32x128xf32> -> vector<32x128xf32>
    %c1 = arith.constant 1 : index
    %c0_6 = arith.constant 0 : index
    %c0_7 = arith.constant 0 : index
    %5 = vector.load %arg1[%c1, %c0_6, %c0_7] : memref<2x32x32xf32, #tpu.memory_space<vmem>>, vector<1x32x32xf32>
    %6 = vector.shape_cast %5 : vector<1x32x32xf32> to vector<32x32xf32>
    %cst_8 = arith.constant dense<0.000000e+00> : vector<32x128xf32>
    %7 = tpu.matmul %6, %0, %cst_8 {dimension_numbers = #tpu.dot_dimension_numbers<[1], [0], [0], [1], [0, 0, 1, 1], [], []>} : vector<32x32xf32>, vector<32x128xf32>, vector<32x128xf32> -> vector<32x128xf32>
    %8 = tpu.concatenate %4, %0, %7 in 1 : vector<32x128xf32>, vector<32x128xf32>, vector<32x128xf32> -> vector<32x384xf32>
    %c0_9 = arith.constant 0 : index
    %c0_10 = arith.constant 0 : index
    %9 = vector.load %arg3[%c0_9, %c0_10] : memref<384x128xf32, #tpu.memory_space<vmem>>, vector<384x128xf32>
    %cst_11 = arith.constant dense<0.000000e+00> : vector<32x128xf32>
    %10 = tpu.matmul %8, %9, %cst_11 {dimension_numbers = #tpu.dot_dimension_numbers<[1], [0], [0], [1], [0, 0, 1, 1], [], []>} : vector<32x384xf32>, vector<384x128xf32>, vector<32x128xf32> -> vector<32x128xf32>
    %c0_12 = arith.constant 0 : index
    %c0_13 = arith.constant 0 : index
    %11 = vector.load %arg5[%c0_12, %c0_13] : memref<1x128xf32, #tpu.memory_space<vmem>>, vector<1x128xf32>
    %c0_14 = arith.constant 0 : index
    %c0_15 = arith.constant 0 : index
    %12 = vector.load %arg6[%c0_14, %c0_15] : memref<1x128xf32, #tpu.memory_space<vmem>>, vector<1x128xf32>
    %cst_16 = arith.constant dense<0.000000e+00> : vector<128xf32>
    %13 = vector.multi_reduction <add>, %10, %cst_16 [0] : vector<32x128xf32> to vector<128xf32>
    %14 = vector.shape_cast %13 : vector<128xf32> to vector<1x128xf32>
    %cst_17 = arith.constant dense<0.000000e+00> : vector<1x128xf32>
    %15 = tpu.matmul %14, %1, %cst_17 {dimension_numbers = #tpu.dot_dimension_numbers<[1], [0], [0], [1], [0, 0, 1, 1], [], []>} : vector<1x128xf32>, vector<128x128xf32>, vector<1x128xf32> -> vector<1x128xf32>
    %16 = arith.mulf %10, %10 : vector<32x128xf32>
    %cst_18 = arith.constant dense<0.000000e+00> : vector<128xf32>
    %17 = vector.multi_reduction <add>, %16, %cst_18 [0] : vector<32x128xf32> to vector<128xf32>
    %18 = vector.shape_cast %17 : vector<128xf32> to vector<1x128xf32>
    %cst_19 = arith.constant dense<0.000000e+00> : vector<1x128xf32>
    %19 = tpu.matmul %18, %1, %cst_19 {dimension_numbers = #tpu.dot_dimension_numbers<[1], [0], [0], [1], [0, 0, 1, 1], [], []>} : vector<1x128xf32>, vector<128x128xf32>, vector<1x128xf32> -> vector<1x128xf32>
    %cst_20 = arith.constant 0.001953125 : f32
    %20 = vector.broadcast %cst_20 : f32 to vector<1x128xf32>
    %21 = arith.mulf %15, %20 : vector<1x128xf32>
    %cst_21 = arith.constant 0.001953125 : f32
    %22 = vector.broadcast %cst_21 : f32 to vector<1x128xf32>
    %23 = arith.mulf %19, %22 : vector<1x128xf32>
    %24 = arith.mulf %21, %21 : vector<1x128xf32>
    %25 = arith.subf %23, %24 : vector<1x128xf32>
    %26 = vector.broadcast %21 : vector<1x128xf32> to vector<32x128xf32>
    %27 = arith.subf %10, %26 : vector<32x128xf32>
    %cst_22 = arith.constant 9.99999974E-6 : f32
    %28 = vector.broadcast %cst_22 : f32 to vector<1x128xf32>
    %29 = arith.addf %25, %28 : vector<1x128xf32>
    %30 = math.rsqrt %29 : vector<1x128xf32>
    %31 = vector.broadcast %30 : vector<1x128xf32> to vector<32x128xf32>
    %32 = arith.mulf %27, %31 : vector<32x128xf32>
    %33 = vector.broadcast %11 : vector<1x128xf32> to vector<32x128xf32>
    %34 = arith.mulf %32, %33 : vector<32x128xf32>
    %35 = vector.broadcast %12 : vector<1x128xf32> to vector<32x128xf32>
    %36 = arith.addf %34, %35 : vector<32x128xf32>
    %cst_23 = arith.constant 0.000000e+00 : f32
    %37 = vector.broadcast %cst_23 : f32 to vector<32x128xf32>
    %38 = arith.maximumf %36, %37 : vector<32x128xf32>
    %c0_24 = arith.constant 0 : index
    %c0_25 = arith.constant 0 : index
    %c0_26 = arith.constant 0 : index
    %39 = vector.load %arg1[%c0_24, %c0_25, %c0_26] : memref<2x32x32xf32, #tpu.memory_space<vmem>>, vector<1x32x32xf32>
    %40 = vector.shape_cast %39 : vector<1x32x32xf32> to vector<32x32xf32>
    %cst_27 = arith.constant dense<0.000000e+00> : vector<32x128xf32>
    %41 = tpu.matmul %40, %38, %cst_27 {dimension_numbers = #tpu.dot_dimension_numbers<[1], [0], [0], [1], [0, 0, 1, 1], [], []>} : vector<32x32xf32>, vector<32x128xf32>, vector<32x128xf32> -> vector<32x128xf32>
    %c1_28 = arith.constant 1 : index
    %c0_29 = arith.constant 0 : index
    %c0_30 = arith.constant 0 : index
    %42 = vector.load %arg1[%c1_28, %c0_29, %c0_30] : memref<2x32x32xf32, #tpu.memory_space<vmem>>, vector<1x32x32xf32>
    %43 = vector.shape_cast %42 : vector<1x32x32xf32> to vector<32x32xf32>
    %cst_31 = arith.constant dense<0.000000e+00> : vector<32x128xf32>
    %44 = tpu.matmul %43, %38, %cst_31 {dimension_numbers = #tpu.dot_dimension_numbers<[1], [0], [0], [1], [0, 0, 1, 1], [], []>} : vector<32x32xf32>, vector<32x128xf32>, vector<32x128xf32> -> vector<32x128xf32>
    %45 = tpu.concatenate %41, %38, %44 in 1 : vector<32x128xf32>, vector<32x128xf32>, vector<32x128xf32> -> vector<32x384xf32>
    %c0_32 = arith.constant 0 : index
    %c0_33 = arith.constant 0 : index
    %46 = vector.load %arg4[%c0_32, %c0_33] : memref<384x128xf32, #tpu.memory_space<vmem>>, vector<384x128xf32>
    %cst_34 = arith.constant dense<0.000000e+00> : vector<32x128xf32>
    %47 = tpu.matmul %45, %46, %cst_34 {dimension_numbers = #tpu.dot_dimension_numbers<[1], [0], [0], [1], [0, 0, 1, 1], [], []>} : vector<32x384xf32>, vector<384x128xf32>, vector<32x128xf32> -> vector<32x128xf32>
    %c0_35 = arith.constant 0 : index
    %c0_36 = arith.constant 0 : index
    %48 = vector.load %arg7[%c0_35, %c0_36] : memref<1x128xf32, #tpu.memory_space<vmem>>, vector<1x128xf32>
    %c0_37 = arith.constant 0 : index
    %c0_38 = arith.constant 0 : index
    %49 = vector.load %arg8[%c0_37, %c0_38] : memref<1x128xf32, #tpu.memory_space<vmem>>, vector<1x128xf32>
    %cst_39 = arith.constant dense<0.000000e+00> : vector<128xf32>
    %50 = vector.multi_reduction <add>, %47, %cst_39 [0] : vector<32x128xf32> to vector<128xf32>
    %51 = vector.shape_cast %50 : vector<128xf32> to vector<1x128xf32>
    %cst_40 = arith.constant dense<0.000000e+00> : vector<1x128xf32>
    %52 = tpu.matmul %51, %1, %cst_40 {dimension_numbers = #tpu.dot_dimension_numbers<[1], [0], [0], [1], [0, 0, 1, 1], [], []>} : vector<1x128xf32>, vector<128x128xf32>, vector<1x128xf32> -> vector<1x128xf32>
    %53 = arith.mulf %47, %47 : vector<32x128xf32>
    %cst_41 = arith.constant dense<0.000000e+00> : vector<128xf32>
    %54 = vector.multi_reduction <add>, %53, %cst_41 [0] : vector<32x128xf32> to vector<128xf32>
    %55 = vector.shape_cast %54 : vector<128xf32> to vector<1x128xf32>
    %cst_42 = arith.constant dense<0.000000e+00> : vector<1x128xf32>
    %56 = tpu.matmul %55, %1, %cst_42 {dimension_numbers = #tpu.dot_dimension_numbers<[1], [0], [0], [1], [0, 0, 1, 1], [], []>} : vector<1x128xf32>, vector<128x128xf32>, vector<1x128xf32> -> vector<1x128xf32>
    %cst_43 = arith.constant 0.001953125 : f32
    %57 = vector.broadcast %cst_43 : f32 to vector<1x128xf32>
    %58 = arith.mulf %52, %57 : vector<1x128xf32>
    %cst_44 = arith.constant 0.001953125 : f32
    %59 = vector.broadcast %cst_44 : f32 to vector<1x128xf32>
    %60 = arith.mulf %56, %59 : vector<1x128xf32>
    %61 = arith.mulf %58, %58 : vector<1x128xf32>
    %62 = arith.subf %60, %61 : vector<1x128xf32>
    %63 = vector.broadcast %58 : vector<1x128xf32> to vector<32x128xf32>
    %64 = arith.subf %47, %63 : vector<32x128xf32>
    %cst_45 = arith.constant 9.99999974E-6 : f32
    %65 = vector.broadcast %cst_45 : f32 to vector<1x128xf32>
    %66 = arith.addf %62, %65 : vector<1x128xf32>
    %67 = math.rsqrt %66 : vector<1x128xf32>
    %68 = vector.broadcast %67 : vector<1x128xf32> to vector<32x128xf32>
    %69 = arith.mulf %64, %68 : vector<32x128xf32>
    %70 = vector.broadcast %48 : vector<1x128xf32> to vector<32x128xf32>
    %71 = arith.mulf %69, %70 : vector<32x128xf32>
    %72 = vector.broadcast %49 : vector<1x128xf32> to vector<32x128xf32>
    %73 = arith.addf %71, %72 : vector<32x128xf32>
    %74 = arith.addf %73, %0 : vector<32x128xf32>
    %cst_46 = arith.constant 0.000000e+00 : f32
    %75 = vector.broadcast %cst_46 : f32 to vector<32x128xf32>
    %76 = arith.maximumf %74, %75 : vector<32x128xf32>
    %c0_47 = arith.constant 0 : index
    %c0_48 = arith.constant 0 : index
    %77 = vector.load %arg9[%c0_47, %c0_48] : memref<32x128xf32, #tpu.memory_space<vmem>>, vector<32x128xf32>
    tpu.vector_store %arg9[%c0_47, %c0_48], %76 {strides = array<i32>} : memref<32x128xf32, #tpu.memory_space<vmem>>, vector<32x128xf32>,
    return
  }
}

</mosaic_0001>

<llo_original>
// kernel: basic_block_forward.1
$region0: #{basic_block_forward.1}
  #allocation0 [shape = 'u32[]', space=smem, size = 0x4, offset = 0x4, fixed_abs, tag = 'smem constant byte address 0x4 - core index']
  #allocation1 [shape = 'u32[144,128]{1,0:T(1,128)}', space=vmem, size = 0x12000, scoped, tag = 'internal scratch']
  %s0 = inlined_call_operand.vmem [shape: f32[32,128], index: 0, kind: input, shape index: {}]
  %s1 = inlined_call_operand.vmem [shape: f32[2,32,32], index: 1, kind: input, shape index: {}]
  %s2 = inlined_call_operand.vmem [shape: f32[128,128], index: 2, kind: input, shape index: {}]
  %s3 = inlined_call_operand.vmem [shape: f32[384,128], index: 3, kind: input, shape index: {}]
  %s4 = inlined_call_operand.vmem [shape: f32[384,128], index: 4, kind: input, shape index: {}]
  %s5 = inlined_call_operand.vmem [shape: f32[1,128], index: 5, kind: input, shape index: {}]
  %s6 = inlined_call_operand.vmem [shape: f32[1,128], index: 6, kind: input, shape index: {}]
  %s7 = inlined_call_operand.vmem [shape: f32[1,128], index: 7, kind: input, shape index: {}]
  %s8 = inlined_call_operand.vmem [shape: f32[1,128], index: 8, kind: input, shape index: {}]
  %s9 = inlined_call_operand.vmem [shape: f32[32,128], index: 9, kind: output, shape index: {}]
  %s10 = sld [smem:[#allocation0]]
  $region46: #{basic_block_forward.1} parent=0
    _
  %s12 = ssub.s32 1, %s10
  %s13 = scalar_select 0, %s12, %s10
  // Predicated region
  $region2: #{basic_block_forward.1} parent=0 // pred_check
    _
  $region3: #{basic_block_forward.1} parent=0 // pred_check_branch
    %15 = sbr.rel (0) target = $region5
  $region4: #{basic_block_forward.1} parent=0 // pred_region
    _
  $region5: #{basic_block_forward.1} parent=0 // pred_fallthru
    _
  // Predicated region
  $region6: #{basic_block_forward.1} parent=0 // pred_check
    _
  $region7: #{basic_block_forward.1} parent=0 // pred_check_branch
    %17 = sbr.rel (0) target = $region9
  $region8: #{basic_block_forward.1} parent=0 // pred_region
    _
  $region9: #{basic_block_forward.1} parent=0 // pred_fallthru
    _
  // Predicated region
  $region10: #{basic_block_forward.1} parent=0 // pred_check
    _
  $region11: #{basic_block_forward.1} parent=0 // pred_check_branch
    %19 = sbr.rel (0) target = $region13
  $region12: #{basic_block_forward.1} parent=0 // pred_region
    _
  $region13: #{basic_block_forward.1} parent=0 // pred_fallthru
    _
  // Predicated region
  $region14: #{basic_block_forward.1} parent=0 // pred_check
    _
  $region15: #{basic_block_forward.1} parent=0 // pred_check_branch
    %21 = sbr.rel (0) target = $region17
  $region16: #{basic_block_forward.1} parent=0 // pred_region
    _
  $region17: #{basic_block_forward.1} parent=0 // pred_fallthru
    _
  // Predicated region
  $region18: #{basic_block_forward.1} parent=0 // pred_check
    _
  $region19: #{basic_block_forward.1} parent=0 // pred_check_branch
    %23 = sbr.rel (0) target = $region21
  $region20: #{basic_block_forward.1} parent=0 // pred_region
    _
  $region21: #{basic_block_forward.1} parent=0 // pred_fallthru
    _
  // Predicated region
  $region22: #{basic_block_forward.1} parent=0 // pred_check
    _
  $region23: #{basic_block_forward.1} parent=0 // pred_check_branch
    %25 = sbr.rel (0) target = $region25
  $region24: #{basic_block_forward.1} parent=0 // pred_region
    _
  $region25: #{basic_block_forward.1} parent=0 // pred_fallthru
    _
  // Predicated region
  $region26: #{basic_block_forward.1} parent=0 // pred_check
    _
  $region27: #{basic_block_forward.1} parent=0 // pred_check_branch
    %27 = sbr.rel (0) target = $region29
  $region28: #{basic_block_forward.1} parent=0 // pred_region
    _
  $region29: #{basic_block_forward.1} parent=0 // pred_fallthru
    _
  // Predicated region
  $region30: #{basic_block_forward.1} parent=0 // pred_check
    _
  $region31: #{basic_block_forward.1} parent=0 // pred_check_branch
    %29 = sbr.rel (0) target = $region33
  $region32: #{basic_block_forward.1} parent=0 // pred_region
    _
  $region33: #{basic_block_forward.1} parent=0 // pred_fallthru
    _
  // Predicated region
  $region34: #{basic_block_forward.1} parent=0 // pred_check
    _
  $region35: #{basic_block_forward.1} parent=0 // pred_check_branch
    %31 = sbr.rel (0) target = $region37
  $region36: #{basic_block_forward.1} parent=0 // pred_region
    _
  $region37: #{basic_block_forward.1} parent=0 // pred_fallthru
    _
  %v32 = vld [vmem:[%s0] sm:$0xff]
  %v33 = vld [vmem:[%s0 + $0x8] sm:$0xff]
  %v34 = vld [vmem:[%s0 + $0x10] sm:$0xff]
  %v35 = vld [vmem:[%s0 + $0x18] sm:$0xff]
  %v36 = vld [vmem:[%s2] sm:$0xff]
  %v37 = vld [vmem:[%s2 + $0x8] sm:$0xff]
  %v38 = vld [vmem:[%s2 + $0x10] sm:$0xff]
  %v39 = vld [vmem:[%s2 + $0x18] sm:$0xff]
  %v40 = vld [vmem:[%s2 + $0x20] sm:$0xff]
  %v41 = vld [vmem:[%s2 + $0x28] sm:$0xff]
  %v42 = vld [vmem:[%s2 + $0x30] sm:$0xff]
  %v43 = vld [vmem:[%s2 + $0x38] sm:$0xff]
  %v44 = vld [vmem:[%s2 + $0x40] sm:$0xff]
  %v45 = vld [vmem:[%s2 + $0x48] sm:$0xff]
  %v46 = vld [vmem:[%s2 + $0x50] sm:$0xff]
  %v47 = vld [vmem:[%s2 + $0x58] sm:$0xff]
  %v48 = vld [vmem:[%s2 + $0x60] sm:$0xff]
  %v49 = vld [vmem:[%s2 + $0x68] sm:$0xff]
  %v50 = vld [vmem:[%s2 + $0x70] sm:$0xff]
  %v51 = vld [vmem:[%s2 + $0x78] sm:$0xff]
  %v52 = vld [vmem:[%s1] sm:$0xff]
  %v53 = vld [vmem:[%s1 + $0x8] sm:$0xff]
  %v54 = vld [vmem:[%s1 + $0x10] sm:$0xff]
  %v55 = vld [vmem:[%s1 + $0x18] sm:$0xff]
  %vm56 = vcmask 261120
  %v58 = vsel %vm56, %v52, 0
  %v61 = vsel %vm56, %v53, 0
  %v64 = vsel %vm56, %v54, 0
  %v67 = vsel %vm56, %v55, 0
  %69 = vmatprep.subr.mxu0 0.0
  %70 = vmatpush1.msra.mxu0 0.0
  %71 = vmatprep.subr.mxu0 0.0
  %72 = vmatpush1.msra.mxu0 0.0
  %73 = vmatprep.subr.mxu0 0.0
  %74 = vmatpush1.msra.mxu0 0.0
  %75 = vmatprep.subr.mxu0 0.0
  %76 = vmatpush1.msra.mxu0 0.0
  %77 = vmatprep.subr.mxu0 0.0
  %78 = vmatpush1.msra.mxu0 0.0
  %79 = vmatprep.subr.mxu0 0.0
  %80 = vmatpush1.msra.mxu0 0.0
  %81 = vmatprep.subr.mxu0 0.0
  %82 = vmatpush1.msra.mxu0 0.0
  %83 = vmatprep.subr.mxu0 0.0
  %84 = vmatpush1.msra.mxu0 0.0
  %85 = vmatprep.subr.mxu0 0.0
  %86 = vmatpush1.msra.mxu0 0.0
  %87 = vmatprep.subr.mxu0 0.0
  %88 = vmatpush1.msra.mxu0 0.0
  %89 = vmatprep.subr.mxu0 0.0
  %90 = vmatpush1.msra.mxu0 0.0
  %91 = vmatprep.subr.mxu0 0.0
  %92 = vmatpush1.msra.mxu0 0.0
  %93 = vmatprep.subr.mxu0 0.0
  %94 = vmatpush1.msra.mxu0 %v35
  %95 = vmatprep.subr.mxu0 0.0
  %96 = vmatpush1.msra.mxu0 %v34
  %97 = vmatprep.subr.mxu0 0.0
  %98 = vmatpush1.msra.mxu0 %v33
  %99 = vmatprep.subr.mxu0 0.0
  %100 = vmatpush1.msra.mxu0 %v32
  %101 = vmatprep.subr.mxu0 0.0
  %102 = vmatpush2.msra.mxu0 0.0
  %103 = vmatprep.subr.mxu0 0.0
  %104 = vmatpush2.msra.mxu0 0.0
  %105 = vmatprep.subr.mxu0 0.0
  %106 = vmatpush2.msra.mxu0 0.0
  %107 = vmatprep.subr.mxu0 0.0
  %108 = vmatpush2.msra.mxu0 0.0
  %109 = vmatprep.subr.mxu0 0.0
  %110 = vmatpush2.msra.mxu0 0.0
  %111 = vmatprep.subr.mxu0 0.0
  %112 = vmatpush2.msra.mxu0 0.0
  %113 = vmatprep.subr.mxu0 0.0
  %114 = vmatpush2.msra.mxu0 0.0
  %115 = vmatprep.subr.mxu0 0.0
  %116 = vmatpush2.msra.mxu0 0.0
  %117 = vmatprep.subr.mxu0 0.0
  %118 = vmatpush2.msra.mxu0 0.0
  %119 = vmatprep.subr.mxu0 0.0
  %120 = vmatpush2.msra.mxu0 0.0
  %121 = vmatprep.subr.mxu0 0.0
  %122 = vmatpush2.msra.mxu0 0.0
  %123 = vmatprep.subr.mxu0 0.0
  %124 = vmatpush2.msra.mxu0 0.0
  %125 = vmatprep.subr.mxu0 0.0
  %126 = vmatpush2.msra.mxu0 0.0
  %127 = vmatprep.subr.mxu0 0.0
  %128 = vmatpush2.msra.mxu0 0.0
  %129 = vmatprep.subr.mxu0 0.0
  %130 = vmatpush2.msra.mxu0 0.0
  %131 = vmatprep.subr.mxu0 0.0
  %132 = vmatpush2.msra.mxu0 0.0
  %133 = vmatprep.mubr.f32.mxu0 0.0
  %134 = vmatmul.mubr.f32.gmra.mxu0 %v58
  %v135 = vpop.f32.mrf.mxu0
  %v136 = vadd.f32 0.0, %v135
  %v137 = vpop.f32.mrf.mxu0
  %138 = vmatprep.mubr.f32.mxu0 0.0
  %139 = vmatmul.mubr.f32.gmra.mxu0 %v61
  %v140 = vpop.f32.mrf.mxu0
  %v141 = vadd.f32 0.0, %v140
  %v142 = vpop.f32.mrf.mxu0
  %143 = vmatprep.mubr.f32.mxu0 0.0
  %144 = vmatmul.mubr.f32.gmra.mxu0 %v64
  %v145 = vpop.f32.mrf.mxu0
  %v146 = vadd.f32 0.0, %v145
  %v147 = vpop.f32.mrf.mxu0
  %148 = vmatprep.mubr.f32.mxu0 0.0
  %149 = vmatmul.mubr.f32.gmra.mxu0 %v67
  %v150 = vpop.f32.mrf.mxu0
  %v151 = vadd.f32 0.0, %v150
  %v152 = vpop.f32.mrf.mxu0
  %153 = vdwg.mxu0
  %s154 = scalar_lea.vmem %s1, 32
  %v155 = vld [vmem:[%s154] sm:$0xff]
  %v156 = vld [vmem:[%s154 + $0x8] sm:$0xff]
  %v157 = vld [vmem:[%s154 + $0x10] sm:$0xff]
  %v158 = vld [vmem:[%s154 + $0x18] sm:$0xff]
  %v160 = vsel %vm56, %v155, 0
  %v163 = vsel %vm56, %v156, 0
  %v166 = vsel %vm56, %v157, 0
  %v169 = vsel %vm56, %v158, 0
  %171 = vmatprep.subr.mxu0 0.0
  %172 = vmatpush1.msra.mxu0 0.0
  %173 = vmatprep.subr.mxu0 0.0
  %174 = vmatpush1.msra.mxu0 0.0
  %175 = vmatprep.subr.mxu0 0.0
  %176 = vmatpush1.msra.mxu0 0.0
  %177 = vmatprep.subr.mxu0 0.0
  %178 = vmatpush1.msra.mxu0 0.0
  %179 = vmatprep.subr.mxu0 0.0
  %180 = vmatpush1.msra.mxu0 0.0
  %181 = vmatprep.subr.mxu0 0.0
  %182 = vmatpush1.msra.mxu0 0.0
  %183 = vmatprep.subr.mxu0 0.0
  %184 = vmatpush1.msra.mxu0 0.0
  %185 = vmatprep.subr.mxu0 0.0
  %186 = vmatpush1.msra.mxu0 0.0
  %187 = vmatprep.subr.mxu0 0.0
  %188 = vmatpush1.msra.mxu0 0.0
  %189 = vmatprep.subr.mxu0 0.0
  %190 = vmatpush1.msra.mxu0 0.0
  %191 = vmatprep.subr.mxu0 0.0
  %192 = vmatpush1.msra.mxu0 0.0
  %193 = vmatprep.subr.mxu0 0.0
  %194 = vmatpush1.msra.mxu0 0.0
  %195 = vmatprep.subr.mxu0 0.0
  %196 = vmatpush1.msra.mxu0 %v35
  %197 = vmatprep.subr.mxu0 0.0
  %198 = vmatpush1.msra.mxu0 %v34
  %199 = vmatprep.subr.mxu0 0.0
  %200 = vmatpush1.msra.mxu0 %v33
  %201 = vmatprep.subr.mxu0 0.0
  %202 = vmatpush1.msra.mxu0 %v32
  %203 = vmatprep.subr.mxu0 0.0
  %204 = vmatpush2.msra.mxu0 0.0
  %205 = vmatprep.subr.mxu0 0.0
  %206 = vmatpush2.msra.mxu0 0.0
  %207 = vmatprep.subr.mxu0 0.0
  %208 = vmatpush2.msra.mxu0 0.0
  %209 = vmatprep.subr.mxu0 0.0
  %210 = vmatpush2.msra.mxu0 0.0
  %211 = vmatprep.subr.mxu0 0.0
  %212 = vmatpush2.msra.mxu0 0.0
  %213 = vmatprep.subr.mxu0 0.0
  %214 = vmatpush2.msra.mxu0 0.0
  %215 = vmatprep.subr.mxu0 0.0
  %216 = vmatpush2.msra.mxu0 0.0
  %217 = vmatprep.subr.mxu0 0.0
  %218 = vmatpush2.msra.mxu0 0.0
  %219 = vmatprep.subr.mxu0 0.0
  %220 = vmatpush2.msra.mxu0 0.0
  %221 = vmatprep.subr.mxu0 0.0
  %222 = vmatpush2.msra.mxu0 0.0
  %223 = vmatprep.subr.mxu0 0.0
  %224 = vmatpush2.msra.mxu0 0.0
  %225 = vmatprep.subr.mxu0 0.0
  %226 = vmatpush2.msra.mxu0 0.0
  %227 = vmatprep.subr.mxu0 0.0
  %228 = vmatpush2.msra.mxu0 0.0
  %229 = vmatprep.subr.mxu0 0.0
  %230 = vmatpush2.msra.mxu0 0.0
  %231 = vmatprep.subr.mxu0 0.0
  %232 = vmatpush2.msra.mxu0 0.0
  %233 = vmatprep.subr.mxu0 0.0
  %234 = vmatpush2.msra.mxu0 0.0
  %235 = vmatprep.mubr.f32.mxu0 0.0
  %236 = vmatmul.mubr.f32.gmra.mxu0 %v160
  %v237 = vpop.f32.mrf.mxu0
  %v238 = vadd.f32 0.0, %v237
  %v239 = vpop.f32.mrf.mxu0
  %240 = vmatprep.mubr.f32.mxu0 0.0
  %241 = vmatmul.mubr.f32.gmra.mxu0 %v163
  %v242 = vpop.f32.mrf.mxu0
  %v243 = vadd.f32 0.0, %v242
  %v244 = vpop.f32.mrf.mxu0
  %245 = vmatprep.mubr.f32.mxu0 0.0
  %246 = vmatmul.mubr.f32.gmra.mxu0 %v166
  %v247 = vpop.f32.mrf.mxu0
  %v248 = vadd.f32 0.0, %v247
  %v249 = vpop.f32.mrf.mxu0
  %250 = vmatprep.mubr.f32.mxu0 0.0
  %251 = vmatmul.mubr.f32.gmra.mxu0 %v169
  %v252 = vpop.f32.mrf.mxu0
  %v253 = vadd.f32 0.0, %v252
  %v254 = vpop.f32.mrf.mxu0
  %255 = vdwg.mxu0
  %v256 = vld [vmem:[%s3] sm:$0xff]
  %v257 = vld [vmem:[%s3 + $0x8] sm:$0xff]
  %v258 = vld [vmem:[%s3 + $0x10] sm:$0xff]
  %v259 = vld [vmem:[%s3 + $0x18] sm:$0xff]
  %v260 = vld [vmem:[%s3 + $0x20] sm:$0xff]
  %v261 = vld [vmem:[%s3 + $0x28] sm:$0xff]
  %v262 = vld [vmem:[%s3 + $0x30] sm:$0xff]
  %v263 = vld [vmem:[%s3 + $0x38] sm:$0xff]
  %v264 = vld [vmem:[%s3 + $0x40] sm:$0xff]
  %v265 = vld [vmem:[%s3 + $0x48] sm:$0xff]
  %v266 = vld [vmem:[%s3 + $0x50] sm:$0xff]
  %v267 = vld [vmem:[%s3 + $0x58] sm:$0xff]
  %v268 = vld [vmem:[%s3 + $0x60] sm:$0xff]
  %v269 = vld [vmem:[%s3 + $0x68] sm:$0xff]
  %v270 = vld [vmem:[%s3 + $0x70] sm:$0xff]
  %v271 = vld [vmem:[%s3 + $0x78] sm:$0xff]
  %v272 = vld [vmem:[%s3 + $0x80] sm:$0xff]
  %v273 = vld [vmem:[%s3 + $0x88] sm:$0xff]
  %v274 = vld [vmem:[%s3 + $0x90] sm:$0xff]
  %v275 = vld [vmem:[%s3 + $0x98] sm:$0xff]
  %v276 = vld [vmem:[%s3 + $0xa0] sm:$0xff]
  %v277 = vld [vmem:[%s3 + $0xa8] sm:$0xff]
  %v278 = vld [vmem:[%s3 + $0xb0] sm:$0xff]
  %v279 = vld [vmem:[%s3 + $0xb8] sm:$0xff]
  %v280 = vld [vmem:[%s3 + $0xc0] sm:$0xff]
  %v281 = vld [vmem:[%s3 + $0xc8] sm:$0xff]
  %v282 = vld [vmem:[%s3 + $0xd0] sm:$0xff]
  %v283 = vld [vmem:[%s3 + $0xd8] sm:$0xff]
  %v284 = vld [vmem:[%s3 + $0xe0] sm:$0xff]
  %v285 = vld [vmem:[%s3 + $0xe8] sm:$0xff]
  %v286 = vld [vmem:[%s3 + $0xf0] sm:$0xff]
  %v287 = vld [vmem:[%s3 + $0xf8] sm:$0xff]
  %v288 = vld [vmem:[%s3 + $0x100] sm:$0xff]
  %v289 = vld [vmem:[%s3 + $0x108] sm:$0xff]
  %v290 = vld [vmem:[%s3 + $0x110] sm:$0xff]
  %v291 = vld [vmem:[%s3 + $0x118] sm:$0xff]
  %v292 = vld [vmem:[%s3 + $0x120] sm:$0xff]
  %v293 = vld [vmem:[%s3 + $0x128] sm:$0xff]
  %v294 = vld [vmem:[%s3 + $0x130] sm:$0xff]
  %v295 = vld [vmem:[%s3 + $0x138] sm:$0xff]
  %v296 = vld [vmem:[%s3 + $0x140] sm:$0xff]
  %v297 = vld [vmem:[%s3 + $0x148] sm:$0xff]
  %v298 = vld [vmem:[%s3 + $0x150] sm:$0xff]
  %v299 = vld [vmem:[%s3 + $0x158] sm:$0xff]
  %v300 = vld [vmem:[%s3 + $0x160] sm:$0xff]
  %v301 = vld [vmem:[%s3 + $0x168] sm:$0xff]
  %v302 = vld [vmem:[%s3 + $0x170] sm:$0xff]
  %v303 = vld [vmem:[%s3 + $0x178] sm:$0xff]
  %304 = vmatprep.subr.mxu0 0.0
  %305 = vmatpush1.msra.mxu0 %v271
  %306 = vmatprep.subr.mxu0 0.0
  %307 = vmatpush1.msra.mxu0 %v270
  %308 = vmatprep.subr.mxu0 0.0
  %309 = vmatpush1.msra.mxu0 %v269
  %310 = vmatprep.subr.mxu0 0.0
  %311 = vmatpush1.msra.mxu0 %v268
  %312 = vmatprep.subr.mxu0 0.0
  %313 = vmatpush1.msra.mxu0 %v267
  %314 = vmatprep.subr.mxu0 0.0
  %315 = vmatpush1.msra.mxu0 %v266
  %316 = vmatprep.subr.mxu0 0.0
  %317 = vmatpush1.msra.mxu0 %v265
  %318 = vmatprep.subr.mxu0 0.0
  %319 = vmatpush1.msra.mxu0 %v264
  %320 = vmatprep.subr.mxu0 0.0
  %321 = vmatpush1.msra.mxu0 %v263
  %322 = vmatprep.subr.mxu0 0.0
  %323 = vmatpush1.msra.mxu0 %v262
  %324 = vmatprep.subr.mxu0 0.0
  %325 = vmatpush1.msra.mxu0 %v261
  %326 = vmatprep.subr.mxu0 0.0
  %327 = vmatpush1.msra.mxu0 %v260
  %328 = vmatprep.subr.mxu0 0.0
  %329 = vmatpush1.msra.mxu0 %v259
  %330 = vmatprep.subr.mxu0 0.0
  %331 = vmatpush1.msra.mxu0 %v258
  %332 = vmatprep.subr.mxu0 0.0
  %333 = vmatpush1.msra.mxu0 %v257
  %334 = vmatprep.subr.mxu0 0.0
  %335 = vmatpush1.msra.mxu0 %v256
  %336 = vmatprep.subr.mxu0 0.0
  %337 = vmatpush2.msra.mxu0 %v287
  %338 = vmatprep.subr.mxu0 0.0
  %339 = vmatpush2.msra.mxu0 %v286
  %340 = vmatprep.subr.mxu0 0.0
  %341 = vmatpush2.msra.mxu0 %v285
  %342 = vmatprep.subr.mxu0 0.0
  %343 = vmatpush2.msra.mxu0 %v284
  %344 = vmatprep.subr.mxu0 0.0
  %345 = vmatpush2.msra.mxu0 %v283
  %346 = vmatprep.subr.mxu0 0.0
  %347 = vmatpush2.msra.mxu0 %v282
  %348 = vmatprep.subr.mxu0 0.0
  %349 = vmatpush2.msra.mxu0 %v281
  %350 = vmatprep.subr.mxu0 0.0
  %351 = vmatpush2.msra.mxu0 %v280
  %352 = vmatprep.subr.mxu0 0.0
  %353 = vmatpush2.msra.mxu0 %v279
  %354 = vmatprep.subr.mxu0 0.0
  %355 = vmatpush2.msra.mxu0 %v278
  %356 = vmatprep.subr.mxu0 0.0
  %357 = vmatpush2.msra.mxu0 %v277
  %358 = vmatprep.subr.mxu0 0.0
  %359 = vmatpush2.msra.mxu0 %v276
  %360 = vmatprep.subr.mxu0 0.0
  %361 = vmatpush2.msra.mxu0 %v275
  %362 = vmatprep.subr.mxu0 0.0
  %363 = vmatpush2.msra.mxu0 %v274
  %364 = vmatprep.subr.mxu0 0.0
  %365 = vmatpush2.msra.mxu0 %v273
  %366 = vmatprep.subr.mxu0 0.0
  %367 = vmatpush2.msra.mxu0 %v272
  %368 = vmatprep.mubr.f32.mxu0 %v32
  %369 = vmatmul.mubr.f32.gmra.mxu0 %v136
  %v370 = vpop.f32.mrf.mxu0
  %v371 = vadd.f32 0.0, %v370
  %v372 = vpop.f32.mrf.mxu0
  %373 = vmatprep.mubr.f32.mxu0 %v33
  %374 = vmatmul.mubr.f32.gmra.mxu0 %v141
  %v375 = vpop.f32.mrf.mxu0
  %v376 = vadd.f32 0.0, %v375
  %v377 = vpop.f32.mrf.mxu0
  %378 = vmatprep.mubr.f32.mxu0 %v34
  %379 = vmatmul.mubr.f32.gmra.mxu0 %v146
  %v380 = vpop.f32.mrf.mxu0
  %v381 = vadd.f32 0.0, %v380
  %v382 = vpop.f32.mrf.mxu0
  %383 = vmatprep.mubr.f32.mxu0 %v35
  %384 = vmatmul.mubr.f32.gmra.mxu0 %v151
  %v385 = vpop.f32.mrf.mxu0
  %v386 = vadd.f32 0.0, %v385
  %v387 = vpop.f32.mrf.mxu0
  %388 = vdwg.mxu0
  %389 = vmatprep.subr.mxu0 0.0
  %390 = vmatpush1.msra.mxu0 %v303
  %391 = vmatprep.subr.mxu0 0.0
  %392 = vmatpush1.msra.mxu0 %v302
  %393 = vmatprep.subr.mxu0 0.0
  %394 = vmatpush1.msra.mxu0 %v301
  %395 = vmatprep.subr.mxu0 0.0
  %396 = vmatpush1.msra.mxu0 %v300
  %397 = vmatprep.subr.mxu0 0.0
  %398 = vmatpush1.msra.mxu0 %v299
  %399 = vmatprep.subr.mxu0 0.0
  %400 = vmatpush1.msra.mxu0 %v298
  %401 = vmatprep.subr.mxu0 0.0
  %402 = vmatpush1.msra.mxu0 %v297
  %403 = vmatprep.subr.mxu0 0.0
  %404 = vmatpush1.msra.mxu0 %v296
  %405 = vmatprep.subr.mxu0 0.0
  %406 = vmatpush1.msra.mxu0 %v295
  %407 = vmatprep.subr.mxu0 0.0
  %408 = vmatpush1.msra.mxu0 %v294
  %409 = vmatprep.subr.mxu0 0.0
  %410 = vmatpush1.msra.mxu0 %v293
  %411 = vmatprep.subr.mxu0 0.0
  %412 = vmatpush1.msra.mxu0 %v292
  %413 = vmatprep.subr.mxu0 0.0
  %414 = vmatpush1.msra.mxu0 %v291
  %415 = vmatprep.subr.mxu0 0.0
  %416 = vmatpush1.msra.mxu0 %v290
  %417 = vmatprep.subr.mxu0 0.0
  %418 = vmatpush1.msra.mxu0 %v289
  %419 = vmatprep.subr.mxu0 0.0
  %420 = vmatpush1.msra.mxu0 %v288
  %421 = vmatprep.subr.mxu0 0.0
  %422 = vmatpush2.msra.mxu0 0.0
  %423 = vmatprep.subr.mxu0 0.0
  %424 = vmatpush2.msra.mxu0 0.0
  %425 = vmatprep.subr.mxu0 0.0
  %426 = vmatpush2.msra.mxu0 0.0
  %427 = vmatprep.subr.mxu0 0.0
  %428 = vmatpush2.msra.mxu0 0.0
  %429 = vmatprep.subr.mxu0 0.0
  %430 = vmatpush2.msra.mxu0 0.0
  %431 = vmatprep.subr.mxu0 0.0
  %432 = vmatpush2.msra.mxu0 0.0
  %433 = vmatprep.subr.mxu0 0.0
  %434 = vmatpush2.msra.mxu0 0.0
  %435 = vmatprep.subr.mxu0 0.0
  %436 = vmatpush2.msra.mxu0 0.0
  %437 = vmatprep.subr.mxu0 0.0
  %438 = vmatpush2.msra.mxu0 0.0
  %439 = vmatprep.subr.mxu0 0.0
  %440 = vmatpush2.msra.mxu0 0.0
  %441 = vmatprep.subr.mxu0 0.0
  %442 = vmatpush2.msra.mxu0 0.0
  %443 = vmatprep.subr.mxu0 0.0
  %444 = vmatpush2.msra.mxu0 0.0
  %445 = vmatprep.subr.mxu0 0.0
  %446 = vmatpush2.msra.mxu0 0.0
  %447 = vmatprep.subr.mxu0 0.0
  %448 = vmatpush2.msra.mxu0 0.0
  %449 = vmatprep.subr.mxu0 0.0
  %450 = vmatpush2.msra.mxu0 0.0
  %451 = vmatprep.subr.mxu0 0.0
  %452 = vmatpush2.msra.mxu0 0.0
  %453 = vmatprep.mubr.f32.mxu0 0.0
  %454 = vmatmul.mubr.f32.gmra.mxu0 %v238
  %v455 = vpop.f32.mrf.mxu0
  %v456 = vadd.f32 %v371, %v455
  %v457 = vpop.f32.mrf.mxu0
  %458 = vmatprep.mubr.f32.mxu0 0.0
  %459 = vmatmul.mubr.f32.gmra.mxu0 %v243
  %v460 = vpop.f32.mrf.mxu0
  %v461 = vadd.f32 %v376, %v460
  %v462 = vpop.f32.mrf.mxu0
  %463 = vmatprep.mubr.f32.mxu0 0.0
  %464 = vmatmul.mubr.f32.gmra.mxu0 %v248
  %v465 = vpop.f32.mrf.mxu0
  %v466 = vadd.f32 %v381, %v465
  %v467 = vpop.f32.mrf.mxu0
  %468 = vmatprep.mubr.f32.mxu0 0.0
  %469 = vmatmul.mubr.f32.gmra.mxu0 %v253
  %v470 = vpop.f32.mrf.mxu0
  %v471 = vadd.f32 %v386, %v470
  %v472 = vpop.f32.mrf.mxu0
  %473 = vdwg.mxu0
  %v474 = vld [vmem:[%s5] sm:$0x1]
  %v475 = vld [vmem:[%s6] sm:$0x1]
  %v476 = vadd.f32 %v456, %v461
  %v477 = vadd.f32 %v476, %v466
  %v478 = vadd.f32 %v477, %v471
  %v479 = vrot.slane %v478, 4
  %v480 = vadd.f32 %v478, %v479
  %v481 = vrot.slane %v480, 2
  %v482 = vadd.f32 %v480, %v481
  %v483 = vrot.slane %v482, 1
  %v484 = vadd.f32 %v482, %v483
  %485 = vmatprep.subr.mxu0 0.0
  %486 = vmatpush1.msra.mxu0 %v51
  %487 = vmatprep.subr.mxu0 0.0
  %488 = vmatpush1.msra.mxu0 %v50
  %489 = vmatprep.subr.mxu0 0.0
  %490 = vmatpush1.msra.mxu0 %v49
  %491 = vmatprep.subr.mxu0 0.0
  %492 = vmatpush1.msra.mxu0 %v48
  %493 = vmatprep.subr.mxu0 0.0
  %494 = vmatpush1.msra.mxu0 %v47
  %495 = vmatprep.subr.mxu0 0.0
  %496 = vmatpush1.msra.mxu0 %v46
  %497 = vmatprep.subr.mxu0 0.0
  %498 = vmatpush1.msra.mxu0 %v45
  %499 = vmatprep.subr.mxu0 0.0
  %500 = vmatpush1.msra.mxu0 %v44
  %501 = vmatprep.subr.mxu0 0.0
  %502 = vmatpush1.msra.mxu0 %v43
  %503 = vmatprep.subr.mxu0 0.0
  %504 = vmatpush1.msra.mxu0 %v42
  %505 = vmatprep.subr.mxu0 0.0
  %506 = vmatpush1.msra.mxu0 %v41
  %507 = vmatprep.subr.mxu0 0.0
  %508 = vmatpush1.msra.mxu0 %v40
  %509 = vmatprep.subr.mxu0 0.0
  %510 = vmatpush1.msra.mxu0 %v39
  %511 = vmatprep.subr.mxu0 0.0
  %512 = vmatpush1.msra.mxu0 %v38
  %513 = vmatprep.subr.mxu0 0.0
  %514 = vmatpush1.msra.mxu0 %v37
  %515 = vmatprep.subr.mxu0 0.0
  %516 = vmatpush1.msra.mxu0 %v36
  %517 = vmatprep.subr.mxu0 0.0
  %518 = vmatpush2.msra.mxu0 0.0
  %519 = vmatprep.subr.mxu0 0.0
  %520 = vmatpush2.msra.mxu0 0.0
  %521 = vmatprep.subr.mxu0 0.0
  %522 = vmatpush2.msra.mxu0 0.0
  %523 = vmatprep.subr.mxu0 0.0
  %524 = vmatpush2.msra.mxu0 0.0
  %525 = vmatprep.subr.mxu0 0.0
  %526 = vmatpush2.msra.mxu0 0.0
  %527 = vmatprep.subr.mxu0 0.0
  %528 = vmatpush2.msra.mxu0 0.0
  %529 = vmatprep.subr.mxu0 0.0
  %530 = vmatpush2.msra.mxu0 0.0
  %531 = vmatprep.subr.mxu0 0.0
  %532 = vmatpush2.msra.mxu0 0.0
  %533 = vmatprep.subr.mxu0 0.0
  %534 = vmatpush2.msra.mxu0 0.0
  %535 = vmatprep.subr.mxu0 0.0
  %536 = vmatpush2.msra.mxu0 0.0
  %537 = vmatprep.subr.mxu0 0.0
  %538 = vmatpush2.msra.mxu0 0.0
  %539 = vmatprep.subr.mxu0 0.0
  %540 = vmatpush2.msra.mxu0 0.0
  %541 = vmatprep.subr.mxu0 0.0
  %542 = vmatpush2.msra.mxu0 0.0
  %543 = vmatprep.subr.mxu0 0.0
  %544 = vmatpush2.msra.mxu0 0.0
  %545 = vmatprep.subr.mxu0 0.0
  %546 = vmatpush2.msra.mxu0 0.0
  %547 = vmatprep.subr.mxu0 0.0
  %548 = vmatpush2.msra.mxu0 0.0
  %549 = vmatprep.mubr.f32.mxu0 0.0
  %550 = vmatmul.mubr.f32.gmra.mxu0 %v484
  %v551 = vpop.f32.mrf.mxu0
  %v552 = vadd.f32 0.0, %v551
  %v553 = vpop.f32.mrf.mxu0
  %554 = vdwg.mxu0
  %v555 = vmul.f32 %v456, %v456
  %v556 = vmul.f32 %v461, %v461
  %v557 = vmul.f32 %v466, %v466
  %v558 = vmul.f32 %v471, %v471
  %v559 = vadd.f32 %v555, %v556
  %v560 = vadd.f32 %v559, %v557
  %v561 = vadd.f32 %v560, %v558
  %v562 = vrot.slane %v561, 4
  %v563 = vadd.f32 %v561, %v562
  %v564 = vrot.slane %v563, 2
  %v565 = vadd.f32 %v563, %v564
  %v566 = vrot.slane %v565, 1
  %v567 = vadd.f32 %v565, %v566
  %568 = vmatprep.subr.mxu0 0.0
  %569 = vmatpush1.msra.mxu0 %v51
  %570 = vmatprep.subr.mxu0 0.0
  %571 = vmatpush1.msra.mxu0 %v50
  %572 = vmatprep.subr.mxu0 0.0
  %573 = vmatpush1.msra.mxu0 %v49
  %574 = vmatprep.subr.mxu0 0.0
  %575 = vmatpush1.msra.mxu0 %v48
  %576 = vmatprep.subr.mxu0 0.0
  %577 = vmatpush1.msra.mxu0 %v47
  %578 = vmatprep.subr.mxu0 0.0
  %579 = vmatpush1.msra.mxu0 %v46
  %580 = vmatprep.subr.mxu0 0.0
  %581 = vmatpush1.msra.mxu0 %v45
  %582 = vmatprep.subr.mxu0 0.0
  %583 = vmatpush1.msra.mxu0 %v44
  %584 = vmatprep.subr.mxu0 0.0
  %585 = vmatpush1.msra.mxu0 %v43
  %586 = vmatprep.subr.mxu0 0.0
  %587 = vmatpush1.msra.mxu0 %v42
  %588 = vmatprep.subr.mxu0 0.0
  %589 = vmatpush1.msra.mxu0 %v41
  %590 = vmatprep.subr.mxu0 0.0
  %591 = vmatpush1.msra.mxu0 %v40
  %592 = vmatprep.subr.mxu0 0.0
  %593 = vmatpush1.msra.mxu0 %v39
  %594 = vmatprep.subr.mxu0 0.0
  %595 = vmatpush1.msra.mxu0 %v38
  %596 = vmatprep.subr.mxu0 0.0
  %597 = vmatpush1.msra.mxu0 %v37
  %598 = vmatprep.subr.mxu0 0.0
  %599 = vmatpush1.msra.mxu0 %v36
  %600 = vmatprep.subr.mxu0 0.0
  %601 = vmatpush2.msra.mxu0 0.0
  %602 = vmatprep.subr.mxu0 0.0
  %603 = vmatpush2.msra.mxu0 0.0
  %604 = vmatprep.subr.mxu0 0.0
  %605 = vmatpush2.msra.mxu0 0.0
  %606 = vmatprep.subr.mxu0 0.0
  %607 = vmatpush2.msra.mxu0 0.0
  %608 = vmatprep.subr.mxu0 0.0
  %609 = vmatpush2.msra.mxu0 0.0
  %610 = vmatprep.subr.mxu0 0.0
  %611 = vmatpush2.msra.mxu0 0.0
  %612 = vmatprep.subr.mxu0 0.0
  %613 = vmatpush2.msra.mxu0 0.0
  %614 = vmatprep.subr.mxu0 0.0
  %615 = vmatpush2.msra.mxu0 0.0
  %616 = vmatprep.subr.mxu0 0.0
  %617 = vmatpush2.msra.mxu0 0.0
  %618 = vmatprep.subr.mxu0 0.0
  %619 = vmatpush2.msra.mxu0 0.0
  %620 = vmatprep.subr.mxu0 0.0
  %621 = vmatpush2.msra.mxu0 0.0
  %622 = vmatprep.subr.mxu0 0.0
  %623 = vmatpush2.msra.mxu0 0.0
  %624 = vmatprep.subr.mxu0 0.0
  %625 = vmatpush2.msra.mxu0 0.0
  %626 = vmatprep.subr.mxu0 0.0
  %627 = vmatpush2.msra.mxu0 0.0
  %628 = vmatprep.subr.mxu0 0.0
  %629 = vmatpush2.msra.mxu0 0.0
  %630 = vmatprep.subr.mxu0 0.0
  %631 = vmatpush2.msra.mxu0 0.0
  %632 = vmatprep.mubr.f32.mxu0 0.0
  %633 = vmatmul.mubr.f32.gmra.mxu0 %v567
  %v634 = vpop.f32.mrf.mxu0
  %v635 = vadd.f32 0.0, %v634
  %v636 = vpop.f32.mrf.mxu0
  %637 = vdwg.mxu0
  %v638 = vmul.f32 %v552, 0.001953125
  %v639 = vmul.f32 %v635, 0.001953125
  %v640 = vmul.f32 %v638, %v638
  %v641 = vsub.f32 %v639, %v640
  %v642 = vlaneseq
  %v643 = vshrl.u32 %v642, 7
  %v644 = vsub.s32 0, %v643
  %v645 = vrot.slane %v638, %v644
  %v646 = vsub.f32 %v456, %v645
  %v647 = vsub.f32 %v461, %v645
  %v648 = vsub.f32 %v466, %v645
  %v649 = vsub.f32 %v471, %v645
  %v650 = vadd.f32 %v641, 1e-05
  %v651 = vrsqrt.pop %v650
  %v652 = vlaneseq
  %v653 = vshrl.u32 %v652, 7
  %v654 = vsub.s32 0, %v653
  %v655 = vrot.slane %v651, %v654
  %v656 = vmul.f32 %v646, %v655
  %v657 = vmul.f32 %v647, %v655
  %v658 = vmul.f32 %v648, %v655
  %v659 = vmul.f32 %v649, %v655
  %v661 = vlaneseq
  %v662 = vshrl.u32 %v661, 7
  %v663 = vsub.s32 0, %v662
  %v664 = vrot.slane %v474, %v663
  %v666 = vmul.f32 %v656, %v664
  %v667 = vmul.f32 %v657, %v664
  %v668 = vmul.f32 %v658, %v664
  %v669 = vmul.f32 %v659, %v664
  %v671 = vlaneseq
  %v672 = vshrl.u32 %v671, 7
  %v673 = vsub.s32 0, %v672
  %v674 = vrot.slane %v475, %v673
  %v676 = vadd.f32 %v666, %v674
  %v677 = vadd.f32 %v667, %v674
  %v678 = vadd.f32 %v668, %v674
  %v679 = vadd.f32 %v669, %v674
  %v680 = vmax.f32 %v676, 0.0
  %v681 = vmax.f32 %v677, 0.0
  %v682 = vmax.f32 %v678, 0.0
  %v683 = vmax.f32 %v679, 0.0
  %684 = vmatprep.subr.mxu0 0.0
  %685 = vmatpush1.msra.mxu0 0.0
  %686 = vmatprep.subr.mxu0 0.0
  %687 = vmatpush1.msra.mxu0 0.0
  %688 = vmatprep.subr.mxu0 0.0
  %689 = vmatpush1.msra.mxu0 0.0
  %690 = vmatprep.subr.mxu0 0.0
  %691 = vmatpush1.msra.mxu0 0.0
  %692 = vmatprep.subr.mxu0 0.0
  %693 = vmatpush1.msra.mxu0 0.0
  %694 = vmatprep.subr.mxu0 0.0
  %695 = vmatpush1.msra.mxu0 0.0
  %696 = vmatprep.subr.mxu0 0.0
  %697 = vmatpush1.msra.mxu0 0.0
  %698 = vmatprep.subr.mxu0 0.0
  %699 = vmatpush1.msra.mxu0 0.0
  %700 = vmatprep.subr.mxu0 0.0
  %701 = vmatpush1.msra.mxu0 0.0
  %702 = vmatprep.subr.mxu0 0.0
  %703 = vmatpush1.msra.mxu0 0.0
  %704 = vmatprep.subr.mxu0 0.0
  %705 = vmatpush1.msra.mxu0 0.0
  %706 = vmatprep.subr.mxu0 0.0
  %707 = vmatpush1.msra.mxu0 0.0
  %708 = vmatprep.subr.mxu0 0.0
  %709 = vmatpush1.msra.mxu0 %v683
  %710 = vmatprep.subr.mxu0 0.0
  %711 = vmatpush1.msra.mxu0 %v682
  %712 = vmatprep.subr.mxu0 0.0
  %713 = vmatpush1.msra.mxu0 %v681
  %714 = vmatprep.subr.mxu0 0.0
  %715 = vmatpush1.msra.mxu0 %v680
  %716 = vmatprep.subr.mxu0 0.0
  %717 = vmatpush2.msra.mxu0 0.0
  %718 = vmatprep.subr.mxu0 0.0
  %719 = vmatpush2.msra.mxu0 0.0
  %720 = vmatprep.subr.mxu0 0.0
  %721 = vmatpush2.msra.mxu0 0.0
  %722 = vmatprep.subr.mxu0 0.0
  %723 = vmatpush2.msra.mxu0 0.0
  %724 = vmatprep.subr.mxu0 0.0
  %725 = vmatpush2.msra.mxu0 0.0
  %726 = vmatprep.subr.mxu0 0.0
  %727 = vmatpush2.msra.mxu0 0.0
  %728 = vmatprep.subr.mxu0 0.0
  %729 = vmatpush2.msra.mxu0 0.0
  %730 = vmatprep.subr.mxu0 0.0
  %731 = vmatpush2.msra.mxu0 0.0
  %732 = vmatprep.subr.mxu0 0.0
  %733 = vmatpush2.msra.mxu0 0.0
  %734 = vmatprep.subr.mxu0 0.0
  %735 = vmatpush2.msra.mxu0 0.0
  %736 = vmatprep.subr.mxu0 0.0
  %737 = vmatpush2.msra.mxu0 0.0
  %738 = vmatprep.subr.mxu0 0.0
  %739 = vmatpush2.msra.mxu0 0.0
  %740 = vmatprep.subr.mxu0 0.0
  %741 = vmatpush2.msra.mxu0 0.0
  %742 = vmatprep.subr.mxu0 0.0
  %743 = vmatpush2.msra.mxu0 0.0
  %744 = vmatprep.subr.mxu0 0.0
  %745 = vmatpush2.msra.mxu0 0.0
  %746 = vmatprep.subr.mxu0 0.0
  %747 = vmatpush2.msra.mxu0 0.0
  %748 = vmatprep.mubr.f32.mxu0 0.0
  %749 = vmatmul.mubr.f32.gmra.mxu0 %v58
  %v750 = vpop.f32.mrf.mxu0
  %v751 = vadd.f32 0.0, %v750
  %v752 = vpop.f32.mrf.mxu0
  %753 = vmatprep.mubr.f32.mxu0 0.0
  %754 = vmatmul.mubr.f32.gmra.mxu0 %v61
  %v755 = vpop.f32.mrf.mxu0
  %v756 = vadd.f32 0.0, %v755
  %v757 = vpop.f32.mrf.mxu0
  %758 = vmatprep.mubr.f32.mxu0 0.0
  %759 = vmatmul.mubr.f32.gmra.mxu0 %v64
  %v760 = vpop.f32.mrf.mxu0
  %v761 = vadd.f32 0.0, %v760
  %v762 = vpop.f32.mrf.mxu0
  %763 = vmatprep.mubr.f32.mxu0 0.0
  %764 = vmatmul.mubr.f32.gmra.mxu0 %v67
  %v765 = vpop.f32.mrf.mxu0
  %v766 = vadd.f32 0.0, %v765
  %v767 = vpop.f32.mrf.mxu0
  %768 = vdwg.mxu0
  %769 = vmatprep.subr.mxu0 0.0
  %770 = vmatpush1.msra.mxu0 0.0
  %771 = vmatprep.subr.mxu0 0.0
  %772 = vmatpush1.msra.mxu0 0.0
  %773 = vmatprep.subr.mxu0 0.0
  %774 = vmatpush1.msra.mxu0 0.0
  %775 = vmatprep.subr.mxu0 0.0
  %776 = vmatpush1.msra.mxu0 0.0
  %777 = vmatprep.subr.mxu0 0.0
  %778 = vmatpush1.msra.mxu0 0.0
  %779 = vmatprep.subr.mxu0 0.0
  %780 = vmatpush1.msra.mxu0 0.0
  %781 = vmatprep.subr.mxu0 0.0
  %782 = vmatpush1.msra.mxu0 0.0
  %783 = vmatprep.subr.mxu0 0.0
  %784 = vmatpush1.msra.mxu0 0.0
  %785 = vmatprep.subr.mxu0 0.0
  %786 = vmatpush1.msra.mxu0 0.0
  %787 = vmatprep.subr.mxu0 0.0
  %788 = vmatpush1.msra.mxu0 0.0
  %789 = vmatprep.subr.mxu0 0.0
  %790 = vmatpush1.msra.mxu0 0.0
  %791 = vmatprep.subr.mxu0 0.0
  %792 = vmatpush1.msra.mxu0 0.0
  %793 = vmatprep.subr.mxu0 0.0
  %794 = vmatpush1.msra.mxu0 %v683
  %795 = vmatprep.subr.mxu0 0.0
  %796 = vmatpush1.msra.mxu0 %v682
  %797 = vmatprep.subr.mxu0 0.0
  %798 = vmatpush1.msra.mxu0 %v681
  %799 = vmatprep.subr.mxu0 0.0
  %800 = vmatpush1.msra.mxu0 %v680
  %801 = vmatprep.subr.mxu0 0.0
  %802 = vmatpush2.msra.mxu0 0.0
  %803 = vmatprep.subr.mxu0 0.0
  %804 = vmatpush2.msra.mxu0 0.0
  %805 = vmatprep.subr.mxu0 0.0
  %806 = vmatpush2.msra.mxu0 0.0
  %807 = vmatprep.subr.mxu0 0.0
  %808 = vmatpush2.msra.mxu0 0.0
  %809 = vmatprep.subr.mxu0 0.0
  %810 = vmatpush2.msra.mxu0 0.0
  %811 = vmatprep.subr.mxu0 0.0
  %812 = vmatpush2.msra.mxu0 0.0
  %813 = vmatprep.subr.mxu0 0.0
  %814 = vmatpush2.msra.mxu0 0.0
  %815 = vmatprep.subr.mxu0 0.0
  %816 = vmatpush2.msra.mxu0 0.0
  %817 = vmatprep.subr.mxu0 0.0
  %818 = vmatpush2.msra.mxu0 0.0
  %819 = vmatprep.subr.mxu0 0.0
  %820 = vmatpush2.msra.mxu0 0.0
  %821 = vmatprep.subr.mxu0 0.0
  %822 = vmatpush2.msra.mxu0 0.0
  %823 = vmatprep.subr.mxu0 0.0
  %824 = vmatpush2.msra.mxu0 0.0
  %825 = vmatprep.subr.mxu0 0.0
  %826 = vmatpush2.msra.mxu0 0.0
  %827 = vmatprep.subr.mxu0 0.0
  %828 = vmatpush2.msra.mxu0 0.0
  %829 = vmatprep.subr.mxu0 0.0
  %830 = vmatpush2.msra.mxu0 0.0
  %831 = vmatprep.subr.mxu0 0.0
  %832 = vmatpush2.msra.mxu0 0.0
  %833 = vmatprep.mubr.f32.mxu0 0.0
  %834 = vmatmul.mubr.f32.gmra.mxu0 %v160
  %v835 = vpop.f32.mrf.mxu0
  %v836 = vadd.f32 0.0, %v835
  %v837 = vpop.f32.mrf.mxu0
  %838 = vmatprep.mubr.f32.mxu0 0.0
  %839 = vmatmul.mubr.f32.gmra.mxu0 %v163
  %v840 = vpop.f32.mrf.mxu0
  %v841 = vadd.f32 0.0, %v840
  %v842 = vpop.f32.mrf.mxu0
  %843 = vmatprep.mubr.f32.mxu0 0.0
  %844 = vmatmul.mubr.f32.gmra.mxu0 %v166
  %v845 = vpop.f32.mrf.mxu0
  %v846 = vadd.f32 0.0, %v845
  %v847 = vpop.f32.mrf.mxu0
  %848 = vmatprep.mubr.f32.mxu0 0.0
  %849 = vmatmul.mubr.f32.gmra.mxu0 %v169
  %v850 = vpop.f32.mrf.mxu0
  %v851 = vadd.f32 0.0, %v850
  %v852 = vpop.f32.mrf.mxu0
  %853 = vdwg.mxu0
  %v854 = vld [vmem:[%s4] sm:$0xff]
  %v855 = vld [vmem:[%s4 + $0x8] sm:$0xff]
  %v856 = vld [vmem:[%s4 + $0x10] sm:$0xff]
  %v857 = vld [vmem:[%s4 + $0x18] sm:$0xff]
  %v858 = vld [vmem:[%s4 + $0x20] sm:$0xff]
  %v859 = vld [vmem:[%s4 + $0x28] sm:$0xff]
  %v860 = vld [vmem:[%s4 + $0x30] sm:$0xff]
  %v861 = vld [vmem:[%s4 + $0x38] sm:$0xff]
  %v862 = vld [vmem:[%s4 + $0x40] sm:$0xff]
  %v863 = vld [vmem:[%s4 + $0x48] sm:$0xff]
  %v864 = vld [vmem:[%s4 + $0x50] sm:$0xff]
  %v865 = vld [vmem:[%s4 + $0x58] sm:$0xff]
  %v866 = vld [vmem:[%s4 + $0x60] sm:$0xff]
  %v867 = vld [vmem:[%s4 + $0x68] sm:$0xff]
  %v868 = vld [vmem:[%s4 + $0x70] sm:$0xff]
  %v869 = vld [vmem:[%s4 + $0x78] sm:$0xff]
  %v870 = vld [vmem:[%s4 + $0x80] sm:$0xff]
  %v871 = vld [vmem:[%s4 + $0x88] sm:$0xff]
  %v872 = vld [vmem:[%s4 + $0x90] sm:$0xff]
  %v873 = vld [vmem:[%s4 + $0x98] sm:$0xff]
  %v874 = vld [vmem:[%s4 + $0xa0] sm:$0xff]
  %v875 = vld [vmem:[%s4 + $0xa8] sm:$0xff]
  %v876 = vld [vmem:[%s4 + $0xb0] sm:$0xff]
  %v877 = vld [vmem:[%s4 + $0xb8] sm:$0xff]
  %v878 = vld [vmem:[%s4 + $0xc0] sm:$0xff]
  %v879 = vld [vmem:[%s4 + $0xc8] sm:$0xff]
  %v880 = vld [vmem:[%s4 + $0xd0] sm:$0xff]
  %v881 = vld [vmem:[%s4 + $0xd8] sm:$0xff]
  %v882 = vld [vmem:[%s4 + $0xe0] sm:$0xff]
  %v883 = vld [vmem:[%s4 + $0xe8] sm:$0xff]
  %v884 = vld [vmem:[%s4 + $0xf0] sm:$0xff]
  %v885 = vld [vmem:[%s4 + $0xf8] sm:$0xff]
  %v886 = vld [vmem:[%s4 + $0x100] sm:$0xff]
  %v887 = vld [vmem:[%s4 + $0x108] sm:$0xff]
  %v888 = vld [vmem:[%s4 + $0x110] sm:$0xff]
  %v889 = vld [vmem:[%s4 + $0x118] sm:$0xff]
  %v890 = vld [vmem:[%s4 + $0x120] sm:$0xff]
  %v891 = vld [vmem:[%s4 + $0x128] sm:$0xff]
  %v892 = vld [vmem:[%s4 + $0x130] sm:$0xff]
  %v893 = vld [vmem:[%s4 + $0x138] sm:$0xff]
  %v894 = vld [vmem:[%s4 + $0x140] sm:$0xff]
  %v895 = vld [vmem:[%s4 + $0x148] sm:$0xff]
  %v896 = vld [vmem:[%s4 + $0x150] sm:$0xff]
  %v897 = vld [vmem:[%s4 + $0x158] sm:$0xff]
  %v898 = vld [vmem:[%s4 + $0x160] sm:$0xff]
  %v899 = vld [vmem:[%s4 + $0x168] sm:$0xff]
  %v900 = vld [vmem:[%s4 + $0x170] sm:$0xff]
  %v901 = vld [vmem:[%s4 + $0x178] sm:$0xff]
  %902 = vmatprep.subr.mxu0 0.0
  %903 = vmatpush1.msra.mxu0 %v869
  %904 = vmatprep.subr.mxu0 0.0
  %905 = vmatpush1.msra.mxu0 %v868
  %906 = vmatprep.subr.mxu0 0.0
  %907 = vmatpush1.msra.mxu0 %v867
  %908 = vmatprep.subr.mxu0 0.0
  %909 = vmatpush1.msra.mxu0 %v866
  %910 = vmatprep.subr.mxu0 0.0
  %911 = vmatpush1.msra.mxu0 %v865
  %912 = vmatprep.subr.mxu0 0.0
  %913 = vmatpush1.msra.mxu0 %v864
  %914 = vmatprep.subr.mxu0 0.0
  %915 = vmatpush1.msra.mxu0 %v863
  %916 = vmatprep.subr.mxu0 0.0
  %917 = vmatpush1.msra.mxu0 %v862
  %918 = vmatprep.subr.mxu0 0.0
  %919 = vmatpush1.msra.mxu0 %v861
  %920 = vmatprep.subr.mxu0 0.0
  %921 = vmatpush1.msra.mxu0 %v860
  %922 = vmatprep.subr.mxu0 0.0
  %923 = vmatpush1.msra.mxu0 %v859
  %924 = vmatprep.subr.mxu0 0.0
  %925 = vmatpush1.msra.mxu0 %v858
  %926 = vmatprep.subr.mxu0 0.0
  %927 = vmatpush1.msra.mxu0 %v857
  %928 = vmatprep.subr.mxu0 0.0
  %929 = vmatpush1.msra.mxu0 %v856
  %930 = vmatprep.subr.mxu0 0.0
  %931 = vmatpush1.msra.mxu0 %v855
  %932 = vmatprep.subr.mxu0 0.0
  %933 = vmatpush1.msra.mxu0 %v854
  %934 = vmatprep.subr.mxu0 0.0
  %935 = vmatpush2.msra.mxu0 %v885
  %936 = vmatprep.subr.mxu0 0.0
  %937 = vmatpush2.msra.mxu0 %v884
  %938 = vmatprep.subr.mxu0 0.0
  %939 = vmatpush2.msra.mxu0 %v883
  %940 = vmatprep.subr.mxu0 0.0
  %941 = vmatpush2.msra.mxu0 %v882
  %942 = vmatprep.subr.mxu0 0.0
  %943 = vmatpush2.msra.mxu0 %v881
  %944 = vmatprep.subr.mxu0 0.0
  %945 = vmatpush2.msra.mxu0 %v880
  %946 = vmatprep.subr.mxu0 0.0
  %947 = vmatpush2.msra.mxu0 %v879
  %948 = vmatprep.subr.mxu0 0.0
  %949 = vmatpush2.msra.mxu0 %v878
  %950 = vmatprep.subr.mxu0 0.0
  %951 = vmatpush2.msra.mxu0 %v877
  %952 = vmatprep.subr.mxu0 0.0
  %953 = vmatpush2.msra.mxu0 %v876
  %954 = vmatprep.subr.mxu0 0.0
  %955 = vmatpush2.msra.mxu0 %v875
  %956 = vmatprep.subr.mxu0 0.0
  %957 = vmatpush2.msra.mxu0 %v874
  %958 = vmatprep.subr.mxu0 0.0
  %959 = vmatpush2.msra.mxu0 %v873
  %960 = vmatprep.subr.mxu0 0.0
  %961 = vmatpush2.msra.mxu0 %v872
  %962 = vmatprep.subr.mxu0 0.0
  %963 = vmatpush2.msra.mxu0 %v871
  %964 = vmatprep.subr.mxu0 0.0
  %965 = vmatpush2.msra.mxu0 %v870
  %966 = vmatprep.mubr.f32.mxu0 %v680
  %967 = vmatmul.mubr.f32.gmra.mxu0 %v751
  %v968 = vpop.f32.mrf.mxu0
  %v969 = vadd.f32 0.0, %v968
  %v970 = vpop.f32.mrf.mxu0
  %971 = vmatprep.mubr.f32.mxu0 %v681
  %972 = vmatmul.mubr.f32.gmra.mxu0 %v756
  %v973 = vpop.f32.mrf.mxu0
  %v974 = vadd.f32 0.0, %v973
  %v975 = vpop.f32.mrf.mxu0
  %976 = vmatprep.mubr.f32.mxu0 %v682
  %977 = vmatmul.mubr.f32.gmra.mxu0 %v761
  %v978 = vpop.f32.mrf.mxu0
  %v979 = vadd.f32 0.0, %v978
  %v980 = vpop.f32.mrf.mxu0
  %981 = vmatprep.mubr.f32.mxu0 %v683
  %982 = vmatmul.mubr.f32.gmra.mxu0 %v766
  %v983 = vpop.f32.mrf.mxu0
  %v984 = vadd.f32 0.0, %v983
  %v985 = vpop.f32.mrf.mxu0
  %986 = vdwg.mxu0
  %987 = vmatprep.subr.mxu0 0.0
  %988 = vmatpush1.msra.mxu0 %v901
  %989 = vmatprep.subr.mxu0 0.0
  %990 = vmatpush1.msra.mxu0 %v900
  %991 = vmatprep.subr.mxu0 0.0
  %992 = vmatpush1.msra.mxu0 %v899
  %993 = vmatprep.subr.mxu0 0.0
  %994 = vmatpush1.msra.mxu0 %v898
  %995 = vmatprep.subr.mxu0 0.0
  %996 = vmatpush1.msra.mxu0 %v897
  %997 = vmatprep.subr.mxu0 0.0
  %998 = vmatpush1.msra.mxu0 %v896
  %999 = vmatprep.subr.mxu0 0.0
  %1000 = vmatpush1.msra.mxu0 %v895
  %1001 = vmatprep.subr.mxu0 0.0
  %1002 = vmatpush1.msra.mxu0 %v894
  %1003 = vmatprep.subr.mxu0 0.0
  %1004 = vmatpush1.msra.mxu0 %v893
  %1005 = vmatprep.subr.mxu0 0.0
  %1006 = vmatpush1.msra.mxu0 %v892
  %1007 = vmatprep.subr.mxu0 0.0
  %1008 = vmatpush1.msra.mxu0 %v891
  %1009 = vmatprep.subr.mxu0 0.0
  %1010 = vmatpush1.msra.mxu0 %v890
  %1011 = vmatprep.subr.mxu0 0.0
  %1012 = vmatpush1.msra.mxu0 %v889
  %1013 = vmatprep.subr.mxu0 0.0
  %1014 = vmatpush1.msra.mxu0 %v888
  %1015 = vmatprep.subr.mxu0 0.0
  %1016 = vmatpush1.msra.mxu0 %v887
  %1017 = vmatprep.subr.mxu0 0.0
  %1018 = vmatpush1.msra.mxu0 %v886
  %1019 = vmatprep.subr.mxu0 0.0
  %1020 = vmatpush2.msra.mxu0 0.0
  %1021 = vmatprep.subr.mxu0 0.0
  %1022 = vmatpush2.msra.mxu0 0.0
  %1023 = vmatprep.subr.mxu0 0.0
  %1024 = vmatpush2.msra.mxu0 0.0
  %1025 = vmatprep.subr.mxu0 0.0
  %1026 = vmatpush2.msra.mxu0 0.0
  %1027 = vmatprep.subr.mxu0 0.0
  %1028 = vmatpush2.msra.mxu0 0.0
  %1029 = vmatprep.subr.mxu0 0.0
  %1030 = vmatpush2.msra.mxu0 0.0
  %1031 = vmatprep.subr.mxu0 0.0
  %1032 = vmatpush2.msra.mxu0 0.0
  %1033 = vmatprep.subr.mxu0 0.0
  %1034 = vmatpush2.msra.mxu0 0.0
  %1035 = vmatprep.subr.mxu0 0.0
  %1036 = vmatpush2.msra.mxu0 0.0
  %1037 = vmatprep.subr.mxu0 0.0
  %1038 = vmatpush2.msra.mxu0 0.0
  %1039 = vmatprep.subr.mxu0 0.0
  %1040 = vmatpush2.msra.mxu0 0.0
  %1041 = vmatprep.subr.mxu0 0.0
  %1042 = vmatpush2.msra.mxu0 0.0
  %1043 = vmatprep.subr.mxu0 0.0
  %1044 = vmatpush2.msra.mxu0 0.0
  %1045 = vmatprep.subr.mxu0 0.0
  %1046 = vmatpush2.msra.mxu0 0.0
  %1047 = vmatprep.subr.mxu0 0.0
  %1048 = vmatpush2.msra.mxu0 0.0
  %1049 = vmatprep.subr.mxu0 0.0
  %1050 = vmatpush2.msra.mxu0 0.0
  %1051 = vmatprep.mubr.f32.mxu0 0.0
  %1052 = vmatmul.mubr.f32.gmra.mxu0 %v836
  %v1053 = vpop.f32.mrf.mxu0
  %v1054 = vadd.f32 %v969, %v1053
  %v1055 = vpop.f32.mrf.mxu0
  %1056 = vmatprep.mubr.f32.mxu0 0.0
  %1057 = vmatmul.mubr.f32.gmra.mxu0 %v841
  %v1058 = vpop.f32.mrf.mxu0
  %v1059 = vadd.f32 %v974, %v1058
  %v1060 = vpop.f32.mrf.mxu0
  %1061 = vmatprep.mubr.f32.mxu0 0.0
  %1062 = vmatmul.mubr.f32.gmra.mxu0 %v846
  %v1063 = vpop.f32.mrf.mxu0
  %v1064 = vadd.f32 %v979, %v1063
  %v1065 = vpop.f32.mrf.mxu0
  %1066 = vmatprep.mubr.f32.mxu0 0.0
  %1067 = vmatmul.mubr.f32.gmra.mxu0 %v851
  %v1068 = vpop.f32.mrf.mxu0
  %v1069 = vadd.f32 %v984, %v1068
  %v1070 = vpop.f32.mrf.mxu0
  %1071 = vdwg.mxu0
  %v1072 = vld [vmem:[%s7] sm:$0x1]
  %v1073 = vld [vmem:[%s8] sm:$0x1]
  %v1074 = vadd.f32 %v1054, %v1059
  %v1075 = vadd.f32 %v1074, %v1064
  %v1076 = vadd.f32 %v1075, %v1069
  %v1077 = vrot.slane %v1076, 4
  %v1078 = vadd.f32 %v1076, %v1077
  %v1079 = vrot.slane %v1078, 2
  %v1080 = vadd.f32 %v1078, %v1079
  %v1081 = vrot.slane %v1080, 1
  %v1082 = vadd.f32 %v1080, %v1081
  %1083 = vmatprep.subr.mxu0 0.0
  %1084 = vmatpush1.msra.mxu0 %v51
  %1085 = vmatprep.subr.mxu0 0.0
  %1086 = vmatpush1.msra.mxu0 %v50
  %1087 = vmatprep.subr.mxu0 0.0
  %1088 = vmatpush1.msra.mxu0 %v49
  %1089 = vmatprep.subr.mxu0 0.0
  %1090 = vmatpush1.msra.mxu0 %v48
  %1091 = vmatprep.subr.mxu0 0.0
  %1092 = vmatpush1.msra.mxu0 %v47
  %1093 = vmatprep.subr.mxu0 0.0
  %1094 = vmatpush1.msra.mxu0 %v46
  %1095 = vmatprep.subr.mxu0 0.0
  %1096 = vmatpush1.msra.mxu0 %v45
  %1097 = vmatprep.subr.mxu0 0.0
  %1098 = vmatpush1.msra.mxu0 %v44
  %1099 = vmatprep.subr.mxu0 0.0
  %1100 = vmatpush1.msra.mxu0 %v43
  %1101 = vmatprep.subr.mxu0 0.0
  %1102 = vmatpush1.msra.mxu0 %v42
  %1103 = vmatprep.subr.mxu0 0.0
  %1104 = vmatpush1.msra.mxu0 %v41
  %1105 = vmatprep.subr.mxu0 0.0
  %1106 = vmatpush1.msra.mxu0 %v40
  %1107 = vmatprep.subr.mxu0 0.0
  %1108 = vmatpush1.msra.mxu0 %v39
  %1109 = vmatprep.subr.mxu0 0.0
  %1110 = vmatpush1.msra.mxu0 %v38
  %1111 = vmatprep.subr.mxu0 0.0
  %1112 = vmatpush1.msra.mxu0 %v37
  %1113 = vmatprep.subr.mxu0 0.0
  %1114 = vmatpush1.msra.mxu0 %v36
  %1115 = vmatprep.subr.mxu0 0.0
  %1116 = vmatpush2.msra.mxu0 0.0
  %1117 = vmatprep.subr.mxu0 0.0
  %1118 = vmatpush2.msra.mxu0 0.0
  %1119 = vmatprep.subr.mxu0 0.0
  %1120 = vmatpush2.msra.mxu0 0.0
  %1121 = vmatprep.subr.mxu0 0.0
  %1122 = vmatpush2.msra.mxu0 0.0
  %1123 = vmatprep.subr.mxu0 0.0
  %1124 = vmatpush2.msra.mxu0 0.0
  %1125 = vmatprep.subr.mxu0 0.0
  %1126 = vmatpush2.msra.mxu0 0.0
  %1127 = vmatprep.subr.mxu0 0.0
  %1128 = vmatpush2.msra.mxu0 0.0
  %1129 = vmatprep.subr.mxu0 0.0
  %1130 = vmatpush2.msra.mxu0 0.0
  %1131 = vmatprep.subr.mxu0 0.0
  %1132 = vmatpush2.msra.mxu0 0.0
  %1133 = vmatprep.subr.mxu0 0.0
  %1134 = vmatpush2.msra.mxu0 0.0
  %1135 = vmatprep.subr.mxu0 0.0
  %1136 = vmatpush2.msra.mxu0 0.0
  %1137 = vmatprep.subr.mxu0 0.0
  %1138 = vmatpush2.msra.mxu0 0.0
  %1139 = vmatprep.subr.mxu0 0.0
  %1140 = vmatpush2.msra.mxu0 0.0
  %1141 = vmatprep.subr.mxu0 0.0
  %1142 = vmatpush2.msra.mxu0 0.0
  %1143 = vmatprep.subr.mxu0 0.0
  %1144 = vmatpush2.msra.mxu0 0.0
  %1145 = vmatprep.subr.mxu0 0.0
  %1146 = vmatpush2.msra.mxu0 0.0
  %1147 = vmatprep.mubr.f32.mxu0 0.0
  %1148 = vmatmul.mubr.f32.gmra.mxu0 %v1082
  %v1149 = vpop.f32.mrf.mxu0
  %v1150 = vadd.f32 0.0, %v1149
  %v1151 = vpop.f32.mrf.mxu0
  %1152 = vdwg.mxu0
  %v1153 = vmul.f32 %v1054, %v1054
  %v1154 = vmul.f32 %v1059, %v1059
  %v1155 = vmul.f32 %v1064, %v1064
  %v1156 = vmul.f32 %v1069, %v1069
  %v1157 = vadd.f32 %v1153, %v1154
  %v1158 = vadd.f32 %v1157, %v1155
  %v1159 = vadd.f32 %v1158, %v1156
  %v1160 = vrot.slane %v1159, 4
  %v1161 = vadd.f32 %v1159, %v1160
  %v1162 = vrot.slane %v1161, 2
  %v1163 = vadd.f32 %v1161, %v1162
  %v1164 = vrot.slane %v1163, 1
  %v1165 = vadd.f32 %v1163, %v1164
  %1166 = vmatprep.subr.mxu0 0.0
  %1167 = vmatpush1.msra.mxu0 %v51
  %1168 = vmatprep.subr.mxu0 0.0
  %1169 = vmatpush1.msra.mxu0 %v50
  %1170 = vmatprep.subr.mxu0 0.0
  %1171 = vmatpush1.msra.mxu0 %v49
  %1172 = vmatprep.subr.mxu0 0.0
  %1173 = vmatpush1.msra.mxu0 %v48
  %1174 = vmatprep.subr.mxu0 0.0
  %1175 = vmatpush1.msra.mxu0 %v47
  %1176 = vmatprep.subr.mxu0 0.0
  %1177 = vmatpush1.msra.mxu0 %v46
  %1178 = vmatprep.subr.mxu0 0.0
  %1179 = vmatpush1.msra.mxu0 %v45
  %1180 = vmatprep.subr.mxu0 0.0
  %1181 = vmatpush1.msra.mxu0 %v44
  %1182 = vmatprep.subr.mxu0 0.0
  %1183 = vmatpush1.msra.mxu0 %v43
  %1184 = vmatprep.subr.mxu0 0.0
  %1185 = vmatpush1.msra.mxu0 %v42
  %1186 = vmatprep.subr.mxu0 0.0
  %1187 = vmatpush1.msra.mxu0 %v41
  %1188 = vmatprep.subr.mxu0 0.0
  %1189 = vmatpush1.msra.mxu0 %v40
  %1190 = vmatprep.subr.mxu0 0.0
  %1191 = vmatpush1.msra.mxu0 %v39
  %1192 = vmatprep.subr.mxu0 0.0
  %1193 = vmatpush1.msra.mxu0 %v38
  %1194 = vmatprep.subr.mxu0 0.0
  %1195 = vmatpush1.msra.mxu0 %v37
  %1196 = vmatprep.subr.mxu0 0.0
  %1197 = vmatpush1.msra.mxu0 %v36
  %1198 = vmatprep.subr.mxu0 0.0
  %1199 = vmatpush2.msra.mxu0 0.0
  %1200 = vmatprep.subr.mxu0 0.0
  %1201 = vmatpush2.msra.mxu0 0.0
  %1202 = vmatprep.subr.mxu0 0.0
  %1203 = vmatpush2.msra.mxu0 0.0
  %1204 = vmatprep.subr.mxu0 0.0
  %1205 = vmatpush2.msra.mxu0 0.0
  %1206 = vmatprep.subr.mxu0 0.0
  %1207 = vmatpush2.msra.mxu0 0.0
  %1208 = vmatprep.subr.mxu0 0.0
  %1209 = vmatpush2.msra.mxu0 0.0
  %1210 = vmatprep.subr.mxu0 0.0
  %1211 = vmatpush2.msra.mxu0 0.0
  %1212 = vmatprep.subr.mxu0 0.0
  %1213 = vmatpush2.msra.mxu0 0.0
  %1214 = vmatprep.subr.mxu0 0.0
  %1215 = vmatpush2.msra.mxu0 0.0
  %1216 = vmatprep.subr.mxu0 0.0
  %1217 = vmatpush2.msra.mxu0 0.0
  %1218 = vmatprep.subr.mxu0 0.0
  %1219 = vmatpush2.msra.mxu0 0.0
  %1220 = vmatprep.subr.mxu0 0.0
  %1221 = vmatpush2.msra.mxu0 0.0
  %1222 = vmatprep.subr.mxu0 0.0
  %1223 = vmatpush2.msra.mxu0 0.0
  %1224 = vmatprep.subr.mxu0 0.0
  %1225 = vmatpush2.msra.mxu0 0.0
  %1226 = vmatprep.subr.mxu0 0.0
  %1227 = vmatpush2.msra.mxu0 0.0
  %1228 = vmatprep.subr.mxu0 0.0
  %1229 = vmatpush2.msra.mxu0 0.0
  %1230 = vmatprep.mubr.f32.mxu0 0.0
  %1231 = vmatmul.mubr.f32.gmra.mxu0 %v1165
  %v1232 = vpop.f32.mrf.mxu0
  %v1233 = vadd.f32 0.0, %v1232
  %v1234 = vpop.f32.mrf.mxu0
  %1235 = vdwg.mxu0
  %v1236 = vmul.f32 %v1150, 0.001953125
  %v1237 = vmul.f32 %v1233, 0.001953125
  %v1238 = vmul.f32 %v1236, %v1236
  %v1239 = vsub.f32 %v1237, %v1238
  %v1240 = vlaneseq
  %v1241 = vshrl.u32 %v1240, 7
  %v1242 = vsub.s32 0, %v1241
  %v1243 = vrot.slane %v1236, %v1242
  %v1244 = vsub.f32 %v1054, %v1243
  %v1245 = vsub.f32 %v1059, %v1243
  %v1246 = vsub.f32 %v1064, %v1243
  %v1247 = vsub.f32 %v1069, %v1243
  %v1248 = vadd.f32 %v1239, 1e-05
  %v1249 = vrsqrt.pop %v1248
  %v1250 = vlaneseq
  %v1251 = vshrl.u32 %v1250, 7
  %v1252 = vsub.s32 0, %v1251
  %v1253 = vrot.slane %v1249, %v1252
  %v1254 = vmul.f32 %v1244, %v1253
  %v1255 = vmul.f32 %v1245, %v1253
  %v1256 = vmul.f32 %v1246, %v1253
  %v1257 = vmul.f32 %v1247, %v1253
  %v1259 = vlaneseq
  %v1260 = vshrl.u32 %v1259, 7
  %v1261 = vsub.s32 0, %v1260
  %v1262 = vrot.slane %v1072, %v1261
  %v1264 = vmul.f32 %v1254, %v1262
  %v1265 = vmul.f32 %v1255, %v1262
  %v1266 = vmul.f32 %v1256, %v1262
  %v1267 = vmul.f32 %v1257, %v1262
  %v1269 = vlaneseq
  %v1270 = vshrl.u32 %v1269, 7
  %v1271 = vsub.s32 0, %v1270
  %v1272 = vrot.slane %v1073, %v1271
  %v1274 = vadd.f32 %v1264, %v1272
  %v1275 = vadd.f32 %v1265, %v1272
  %v1276 = vadd.f32 %v1266, %v1272
  %v1277 = vadd.f32 %v1267, %v1272
  %v1278 = vadd.f32 %v1274, %v32
  %v1279 = vadd.f32 %v1275, %v33
  %v1280 = vadd.f32 %v1276, %v34
  %v1281 = vadd.f32 %v1277, %v35
  %v1282 = vmax.f32 %v1278, 0.0
  %v1283 = vmax.f32 %v1279, 0.0
  %v1284 = vmax.f32 %v1280, 0.0
  %v1285 = vmax.f32 %v1281, 0.0
  %1286 = vst [vmem:[%s9] sm:$0xff] %v1282
  %1287 = vst [vmem:[%s9 + $0x8] sm:$0xff] %v1283
  %1288 = vst [vmem:[%s9 + $0x10] sm:$0xff] %v1284
  %1289 = vst [vmem:[%s9 + $0x18] sm:$0xff] %v1285
  // Predicated region
  $region38: #{basic_block_forward.1} parent=0 // pred_check
    _
  $region39: #{basic_block_forward.1} parent=0 // pred_check_branch
    %1291 = sbr.rel (0) target = $region41
  $region40: #{basic_block_forward.1} parent=0 // pred_region
    _
  $region41: #{basic_block_forward.1} parent=0 // pred_fallthru
    _
  // Predicated region
  $region42: #{basic_block_forward.1} parent=0 // pred_check
    _
  $region43: #{basic_block_forward.1} parent=0 // pred_check_branch
    %1293 = sbr.rel (0) target = $region45
  $region44: #{basic_block_forward.1} parent=0 // pred_region
    _
  $region45: #{basic_block_forward.1} parent=0 // pred_fallthru
    _

</llo_original>
